<compile_context>
chip_gen: v7x
topology: tpu7x:2x2x1
jax: 0.10.0
libtpu: 0.0.40
codegen_flags: <defaults>
</compile_context>

<pallas_src>
import jax
import jax.numpy as jnp
from jax import lax
from jax.experimental import pallas as pl
from jax.experimental.pallas import tpu as pltpu


def _round_up(n, m):
    return ((n + m - 1) // m) * m


def _pick_tile_t(T):
    """Largest time-chunk (<=32) that divides T."""
    for cand in (32, 16, 8, 4, 2, 1):
        if T % cand == 0:
            return cand
    return 1


def _lstm_seq_kernel(x_ref, h0_ref, c0_ref, wx_ref, wh_ref, bg_ref, wl_ref, bl_ref,
                     y_ref, h_ref, c_ref):
    """One grid step = TILE_T LSTM timesteps.

    x_ref : (TILE_T, B, I) f32       time-chunk of inputs
    h0/c0 : (B, H) f32               initial state (read only on grid step 0)
    wx    : (I, 4H) bf16             W_ih^T, gate columns permuted to [i, f, o, g]
    wh    : (H, 4H) bf16             W_hh^T, same permutation
    bg    : (1, 4H) f32              fused bias (b_ih + b_hh), permuted
    wl    : (H, P_y) bf16            W_lin^T zero-padded to a 128-lane multiple
    bl    : (1, P_y) f32             bias, zero-padded
    y_ref : (TILE_T, B, P_y) f32     lane-dense per-step linear output
    h_ref/c_ref : (B, H) f32         resident outputs (constant index_map) that carry
                                     the recurrent state across grid steps; written back
                                     to HBM only once, at the end of the grid.
    """
    H = h_ref.shape[-1]
    tile_t = x_ref.shape[0]

    @pl.when(pl.program_id(0) == 0)
    def _():
        h_ref[...] = h0_ref[...]
        c_ref[...] = c0_ref[...]

    # Hoist resident operands out of the unrolled time loop (read once per chunk).
    wx = wx_ref[...]
    wh = wh_ref[...]
    bg = bg_ref[...]
    wl = wl_ref[...]
    bl = bl_ref[...]

    def step(t, carry):
        h, c = carry
        x_t = x_ref[t].astype(jnp.bfloat16)                       # (B, I)

        # Two MXU matmuls into one f32 accumulator (no per-step [x|h] lane concat).
        gates = (jnp.dot(x_t, wx, preferred_element_type=jnp.float32)
                 + jnp.dot(h.astype(jnp.bfloat16), wh,
                           preferred_element_type=jnp.float32)
                 + bg)                                            # (B, 4H) f32

        # Gate order [i, f, o, g]: sigmoid over first 3H, tanh over last H only.
        s = jax.nn.sigmoid(gates[:, :3 * H])
        g_g = jnp.tanh(gates[:, 3 * H:])
        i_g = s[:, 0 * H:1 * H]
        f_g = s[:, 1 * H:2 * H]
        o_g = s[:, 2 * H:3 * H]

        c_new = f_g * c + i_g * g_g                               # f32 elementwise (VPU)
        h_new = o_g * jnp.tanh(c_new)

        # Linear head; wl/bl are pre-padded so this store is lane-dense and unmasked.
        y = jnp.dot(h_new.astype(jnp.bfloat16), wl,
                    preferred_element_type=jnp.float32) + bl      # (B, P_y)
        y_ref[t] = y
        return (h_new, c_new)

    h_fin, c_fin = lax.fori_loop(0, tile_t, step, (h_ref[...], c_ref[...]),
                                 unroll=True)
    h_ref[...] = h_fin
    c_ref[...] = c_fin


def prepare_params(params):
    """One-time weight prep (do this at 'module init', not per forward call).

    params uses PyTorch conventions:
      w_ih (4H, I), w_hh (4H, H), b_ih (4H,), b_hh (4H,), w_lin (O, H), b_lin (O,)
    Gate rows are permuted from PyTorch [i, f, g, o] to [i, f, o, g] so the kernel can
    slice-then-activate (sigmoid on 3H, tanh on H) instead of activating the full 4H twice.
    """
    w_ih, w_hh = params["w_ih"], params["w_hh"]
    four_h = w_ih.shape[0]
    H = four_h // 4
    O = params["w_lin"].shape[0]
    P_y = max(128, _round_up(O, 128))

    def reorder(a):                      # rows [i, f, g, o] -> [i, f, o, g]
        i, f, g, o = jnp.split(a, 4, axis=0)
        return jnp.concatenate([i, f, o, g], axis=0)

    b_gates = reorder(params["b_ih"] + params["b_hh"])
    w_lin_t = params["w_lin"].T                                   # (H, O)
    w_lin_p = jnp.zeros((H, P_y), w_lin_t.dtype).at[:, :O].set(w_lin_t)

    return {
        "w_x": reorder(w_ih).T.astype(jnp.bfloat16),              # (I, 4H)
        "w_h": reorder(w_hh).T.astype(jnp.bfloat16),              # (H, 4H)
        "b_g": b_gates.reshape(1, four_h).astype(jnp.float32),    # (1, 4H)
        "w_lin": w_lin_p.astype(jnp.bfloat16),                    # (H, P_y) zero-padded
        "b_lin": params["b_lin"].reshape(1, O).astype(jnp.float32),  # (1, O) unpadded
    }


def _forward_seq_impl(xs, prepared, last_states):
    """Run the cell over a whole sequence inside ONE pallas_call.

    xs: (T, B, I) f32.  Returns (outputs (T, B, O), (h_T (B, H), c_T (B, H))).
    """
    T, B, I = xs.shape
    H = prepared["w_h"].shape[0]
    O = prepared["b_lin"].shape[1]
    P_y = prepared["w_lin"].shape[1]
    tile_t = _pick_tile_t(T)

    if last_states is None:
        h0 = jnp.zeros((B, H), jnp.float32)
        c0 = jnp.zeros((B, H), jnp.float32)
    else:
        h0, c0 = last_states
        h0 = h0.astype(jnp.float32)
        c0 = c0.astype(jnp.float32)

    # Tiny one-off pad of the linear bias to the lane-dense width (keeps O recoverable
    # from prepared["b_lin"].shape at trace time).
    b_lin_p = jnp.pad(prepared["b_lin"], ((0, 0), (0, P_y - O)))

    # Whole-array VMEM residency: a single copy, not part of the double-buffered pipeline.
    resident = pl.BlockSpec(memory_space=pltpu.MemorySpace.VMEM)

    y_pad, h_t, c_t = pl.pallas_call(
        _lstm_seq_kernel,
        grid=(T // tile_t,),
        in_specs=[
            pl.BlockSpec((tile_t, B, I), lambda t: (t, 0, 0)),    # x time-chunk
            resident,                                             # h0
            resident,                                             # c0
            resident,                                             # w_x
            resident,                                             # w_h
            resident,                                             # b_g
            resident,                                             # w_lin (padded)
            resident,                                             # b_lin (padded)
        ],
        out_specs=(
            pl.BlockSpec((tile_t, B, P_y), lambda t: (t, 0, 0)),  # y per-step, lane-dense
            pl.BlockSpec((B, H), lambda t: (0, 0)),               # h_T (resident, 1 writeback)
            pl.BlockSpec((B, H), lambda t: (0, 0)),               # c_T (resident, 1 writeback)
        ),
        out_shape=(
            jax.ShapeDtypeStruct((T, B, P_y), jnp.float32),
            jax.ShapeDtypeStruct((B, H), jnp.float32),
            jax.ShapeDtypeStruct((B, H), jnp.float32),
        ),
        compiler_params=pltpu.CompilerParams(
            dimension_semantics=("arbitrary",),        # time axis carries the recurrence
            vmem_limit_bytes=32 * 1024 * 1024,
        ),
    )(xs, h0, c0, prepared["w_x"], prepared["w_h"], prepared["b_g"],
      prepared["w_lin"], b_lin_p)

    return y_pad[:, :, :O], (h_t, c_t)


@jax.jit
def lst_model_forward_seq(xs, prepared, last_states=None):
    return _forward_seq_impl(xs, prepared, last_states)


@jax.jit
def lst_model_forward(x, prepared, last_states=None):
    """Single LSTMCell step + Linear, matching LSTModel.forward.

    x: (B, I) f32.  Returns (output (B, O), (hs (B, H), cs (B, H))).
    Reuses the sequence kernel with T=1 (separate y / h / c outputs, no slab slicing).
    """
    outs, (h, c) = _forward_seq_impl(x[None], prepared, last_states)
    return outs[0], (h, c)


def init_params(key, input_size, hidden_size, output_size):
    """Deterministic synthetic init (matches PyTorch param shapes)."""
    ks = jax.random.split(key, 6)
    k = 1.0 / jnp.sqrt(hidden_size)
    u = lambda kk, shape: jax.random.uniform(kk, shape, jnp.float32, -k, k)
    return {
        "w_ih": u(ks[0], (4 * hidden_size, input_size)),
        "w_hh": u(ks[1], (4 * hidden_size, hidden_size)),
        "b_ih": u(ks[2], (4 * hidden_size,)),
        "b_hh": u(ks[3], (4 * hidden_size,)),
        "w_lin": u(ks[4], (output_size, hidden_size)),
        "b_lin": u(ks[5], (output_size,)),
    }


def _reference_forward(x, params, last_states=None):
    """Pure-JAX f32 reference of LSTModel.forward (PyTorch gate order)."""
    B = x.shape[0]
    H = params["w_hh"].shape[1]
    if last_states is None:
        h0 = jnp.zeros((B, H), jnp.float32)
        c0 = jnp.zeros((B, H), jnp.float32)
    else:
        h0, c0 = last_states
    gates = x @ params["w_ih"].T + params["b_ih"] + h0 @ params["w_hh"].T + params["b_hh"]
    i, f, g, o = jnp.split(gates, 4, axis=1)
    c = jax.nn.sigmoid(f) * c0 + jax.nn.sigmoid(i) * jnp.tanh(g)
    h = jax.nn.sigmoid(o) * jnp.tanh(c)
    out = h @ params["w_lin"].T + params["b_lin"]
    return out, (h, c)


if __name__ == "__main__":
    input_size, hidden_size, output_size = 16, 32, 8
    batch = 2      # NOTE: B=2 wastes 6/8 sublanes; batch >= 8 would fill vregs for free.
    seq_len = 8

    key = jax.random.PRNGKey(0)
    kx, kh, kc, kp, ks = jax.random.split(key, 5)

    x = jax.random.normal(kx, (batch, input_size), jnp.float32)
    h_prev = jax.random.normal(kh, (batch, hidden_size), jnp.float32)
    c_prev = jax.random.normal(kc, (batch, hidden_size), jnp.float32)
    xs = jax.random.normal(ks, (seq_len, batch, input_size), jnp.float32)
    params = init_params(kp, input_size, hidden_size, output_size)

    prepared = prepare_params(params)   # once, at "module init"

    # Case 1: single step, last_states provided.
    out, (hs, cs) = lst_model_forward(x, prepared, (h_prev, c_prev))
    jax.block_until_ready((out, hs, cs))

    # Case 2: single step, last_states=None (zero init, as in nn.LSTMCell).
    out0, (hs0, cs0) = lst_model_forward(x, prepared, None)
    jax.block_until_ready((out0, hs0, cs0))

    # Case 3: whole sequence inside one pallas_call (time-chunked grid).
    outs, (hT, cT) = lst_model_forward_seq(xs, prepared, (h_prev, c_prev))
    jax.block_until_ready((outs, hT, cT))

    # Sanity checks vs pure-JAX f32 reference (bf16 matmul inputs -> relaxed tolerance).
    TOL = dict(atol=5e-2, rtol=5e-2)
    ref_out, (ref_h, ref_c) = _reference_forward(x, params, (h_prev, c_prev))
    assert jnp.allclose(out, ref_out, **TOL), "output mismatch (state provided)"
    assert jnp.allclose(hs, ref_h, **TOL), "hidden state mismatch (state provided)"
    assert jnp.allclose(cs, ref_c, **TOL), "cell state mismatch (state provided)"

    ref_out0, (ref_h0, ref_c0) = _reference_forward(x, params, None)
    assert jnp.allclose(out0, ref_out0, **TOL), "output mismatch (zero state)"
    assert jnp.allclose(hs0, ref_h0, **TOL), "hidden state mismatch (zero state)"
    assert jnp.allclose(cs0, ref_c0, **TOL), "cell state mismatch (zero state)"

    # Sequence reference: loop the single-step reference.
    h_ref, c_ref_state = h_prev, c_prev
    ref_outs = []
    for t in range(seq_len):
        o_t, (h_ref, c_ref_state) = _reference_forward(xs[t], params, (h_ref, c_ref_state))
        ref_outs.append(o_t)
    ref_outs = jnp.stack(ref_outs, axis=0)
    STOL = dict(atol=7.5e-2, rtol=7.5e-2)
    assert jnp.allclose(outs, ref_outs, **STOL), "sequence output mismatch"
    assert jnp.allclose(hT, h_ref, **STOL), "sequence final hidden mismatch"
    assert jnp.allclose(cT, c_ref_state, **STOL), "sequence final cell mismatch"

    print("KERNEL_OK")
</pallas_src>

<mosaic_0001>
module attributes {stable_mosaic.version = 11 : i64} {
  func.func @_lstm_seq_kernel(%arg0: i32, %arg1: memref<1x2x16xf32, #tpu.memory_space<vmem>>, %arg2: memref<2x32xf32, #tpu.memory_space<vmem>>, %arg3: memref<2x32xf32, #tpu.memory_space<vmem>>, %arg4: memref<16x128xbf16, #tpu.memory_space<vmem>>, %arg5: memref<32x128xbf16, #tpu.memory_space<vmem>>, %arg6: memref<1x128xf32, #tpu.memory_space<vmem>>, %arg7: memref<32x128xbf16, #tpu.memory_space<vmem>>, %arg8: memref<1x128xf32, #tpu.memory_space<vmem>>, %arg9: memref<1x2x128xf32, #tpu.memory_space<vmem>>, %arg10: memref<2x32xf32, #tpu.memory_space<vmem>>, %arg11: memref<2x32xf32, #tpu.memory_space<vmem>>) attributes {dimension_semantics = [#tpu.dimension_semantics<arbitrary>], iteration_bounds = array<i64: 1>, scalar_prefetch = 0 : i64, scratch_operands = 0 : i64, tpu.core_type = #tpu.core_type<tc>, window_params = [{transform_indices = @transform_0, window_bounds = array<i64: 1, 2, 16>}, {pipeline_mode = #tpu.pipeline_mode<synchronous>, transform_indices = @transform_1, window_bounds = array<i64: 2, 32>}, {pipeline_mode = #tpu.pipeline_mode<synchronous>, transform_indices = @transform_2, window_bounds = array<i64: 2, 32>}, {pipeline_mode = #tpu.pipeline_mode<synchronous>, transform_indices = @transform_3, window_bounds = array<i64: 16, 128>}, {pipeline_mode = #tpu.pipeline_mode<synchronous>, transform_indices = @transform_4, window_bounds = array<i64: 32, 128>}, {pipeline_mode = #tpu.pipeline_mode<synchronous>, transform_indices = @transform_5, window_bounds = array<i64: 1, 128>}, {pipeline_mode = #tpu.pipeline_mode<synchronous>, transform_indices = @transform_6, window_bounds = array<i64: 32, 128>}, {pipeline_mode = #tpu.pipeline_mode<synchronous>, transform_indices = @transform_7, window_bounds = array<i64: 1, 128>}, {transform_indices = @transform_8, window_bounds = array<i64: 1, 2, 128>}, {pipeline_mode = #tpu.pipeline_mode<synchronous>, transform_indices = @transform_9, window_bounds = array<i64: 2, 32>}, {pipeline_mode = #tpu.pipeline_mode<synchronous>, transform_indices = @transform_10, window_bounds = array<i64: 2, 32>}]} {
    %c0_i32 = arith.constant 0 : i32
    %0 = arith.cmpi eq, %arg0, %c0_i32 : i32
    %1 = arith.extui %0 : i1 to i32
    %c0_i32_0 = arith.constant 0 : i32
    %2 = arith.cmpi ne, %1, %c0_i32_0 : i32
    scf.if %2 {
      %c0_26 = arith.constant 0 : index
      %c0_27 = arith.constant 0 : index
      %46 = vector.load %arg2[%c0_26, %c0_27] : memref<2x32xf32, #tpu.memory_space<vmem>>, vector<2x32xf32>
      %c0_28 = arith.constant 0 : index
      %c0_29 = arith.constant 0 : index
      %47 = vector.load %arg10[%c0_28, %c0_29] : memref<2x32xf32, #tpu.memory_space<vmem>>, vector<2x32xf32>
      tpu.vector_store %arg10[%c0_28, %c0_29], %46 {strides = array<i32>} : memref<2x32xf32, #tpu.memory_space<vmem>>, vector<2x32xf32>,
      %c0_30 = arith.constant 0 : index
      %c0_31 = arith.constant 0 : index
      %48 = vector.load %arg3[%c0_30, %c0_31] : memref<2x32xf32, #tpu.memory_space<vmem>>, vector<2x32xf32>
      %c0_32 = arith.constant 0 : index
      %c0_33 = arith.constant 0 : index
      %49 = vector.load %arg11[%c0_32, %c0_33] : memref<2x32xf32, #tpu.memory_space<vmem>>, vector<2x32xf32>
      tpu.vector_store %arg11[%c0_32, %c0_33], %48 {strides = array<i32>} : memref<2x32xf32, #tpu.memory_space<vmem>>, vector<2x32xf32>,
    } else {
    }
    %c0 = arith.constant 0 : index
    %c0_1 = arith.constant 0 : index
    %3 = vector.load %arg4[%c0, %c0_1] : memref<16x128xbf16, #tpu.memory_space<vmem>>, vector<16x128xbf16>
    %c0_2 = arith.constant 0 : index
    %c0_3 = arith.constant 0 : index
    %4 = vector.load %arg5[%c0_2, %c0_3] : memref<32x128xbf16, #tpu.memory_space<vmem>>, vector<32x128xbf16>
    %c0_4 = arith.constant 0 : index
    %c0_5 = arith.constant 0 : index
    %5 = vector.load %arg6[%c0_4, %c0_5] : memref<1x128xf32, #tpu.memory_space<vmem>>, vector<1x128xf32>
    %c0_6 = arith.constant 0 : index
    %c0_7 = arith.constant 0 : index
    %6 = vector.load %arg7[%c0_6, %c0_7] : memref<32x128xbf16, #tpu.memory_space<vmem>>, vector<32x128xbf16>
    %c0_8 = arith.constant 0 : index
    %c0_9 = arith.constant 0 : index
    %7 = vector.load %arg8[%c0_8, %c0_9] : memref<1x128xf32, #tpu.memory_space<vmem>>, vector<1x128xf32>
    %c0_10 = arith.constant 0 : index
    %c0_11 = arith.constant 0 : index
    %8 = vector.load %arg10[%c0_10, %c0_11] : memref<2x32xf32, #tpu.memory_space<vmem>>, vector<2x32xf32>
    %c0_12 = arith.constant 0 : index
    %c0_13 = arith.constant 0 : index
    %9 = vector.load %arg11[%c0_12, %c0_13] : memref<2x32xf32, #tpu.memory_space<vmem>>, vector<2x32xf32>
    %c0_i32_14 = arith.constant 0 : i32
    %10 = arith.index_cast %c0_i32_14 : i32 to index
    %c0_15 = arith.constant 0 : index
    %c0_16 = arith.constant 0 : index
    %11 = vector.load %arg1[%10, %c0_15, %c0_16] : memref<1x2x16xf32, #tpu.memory_space<vmem>>, vector<1x2x16xf32>
    %12 = vector.shape_cast %11 : vector<1x2x16xf32> to vector<2x16xf32>
    %13 = arith.truncf %12 : vector<2x16xf32> to vector<2x16xbf16>
    %cst = arith.constant dense<0.000000e+00> : vector<2x128xf32>
    %14 = tpu.matmul %13, %3, %cst {dimension_numbers = #tpu.dot_dimension_numbers<[1], [0], [0], [1], [0, 0, 1, 1], [], []>} : vector<2x16xbf16>, vector<16x128xbf16>, vector<2x128xf32> -> vector<2x128xf32>
    %15 = arith.truncf %8 : vector<2x32xf32> to vector<2x32xbf16>
    %cst_17 = arith.constant dense<0.000000e+00> : vector<2x128xf32>
    %16 = tpu.matmul %15, %4, %cst_17 {dimension_numbers = #tpu.dot_dimension_numbers<[1], [0], [0], [1], [0, 0, 1, 1], [], []>} : vector<2x32xbf16>, vector<32x128xbf16>, vector<2x128xf32> -> vector<2x128xf32>
    %17 = arith.addf %14, %16 : vector<2x128xf32>
    %18 = vector.broadcast %5 : vector<1x128xf32> to vector<2x128xf32>
    %19 = arith.addf %17, %18 : vector<2x128xf32>
    %20 = vector.extract_strided_slice %19 {offsets = [0, 0], sizes = [2, 96], strides = [1, 1]} : vector<2x128xf32> to vector<2x96xf32>
    %21 = arith.negf %20 : vector<2x96xf32>
    %22 = math.exp %21 : vector<2x96xf32>
    %cst_18 = arith.constant 1.000000e+00 : f32
    %23 = vector.broadcast %cst_18 : f32 to vector<2x96xf32>
    %24 = arith.addf %23, %22 : vector<2x96xf32>
    %25 = arith.divf %23, %24 : vector<2x96xf32>
    %26 = vector.extract_strided_slice %19 {offsets = [0, 96], sizes = [2, 32], strides = [1, 1]} : vector<2x128xf32> to vector<2x32xf32>
    %27 = math.tanh %26 : vector<2x32xf32>
    %28 = vector.extract_strided_slice %25 {offsets = [0, 0], sizes = [2, 32], strides = [1, 1]} : vector<2x96xf32> to vector<2x32xf32>
    %29 = vector.extract_strided_slice %25 {offsets = [0, 32], sizes = [2, 32], strides = [1, 1]} : vector<2x96xf32> to vector<2x32xf32>
    %30 = vector.extract_strided_slice %25 {offsets = [0, 64], sizes = [2, 32], strides = [1, 1]} : vector<2x96xf32> to vector<2x32xf32>
    %31 = arith.mulf %29, %9 : vector<2x32xf32>
    %32 = arith.mulf %28, %27 : vector<2x32xf32>
    %33 = arith.addf %31, %32 : vector<2x32xf32>
    %34 = math.tanh %33 : vector<2x32xf32>
    %35 = arith.mulf %30, %34 : vector<2x32xf32>
    %36 = arith.truncf %35 : vector<2x32xf32> to vector<2x32xbf16>
    %cst_19 = arith.constant dense<0.000000e+00> : vector<2x128xf32>
    %37 = tpu.matmul %36, %6, %cst_19 {dimension_numbers = #tpu.dot_dimension_numbers<[1], [0], [0], [1], [0, 0, 1, 1], [], []>} : vector<2x32xbf16>, vector<32x128xbf16>, vector<2x128xf32> -> vector<2x128xf32>
    %38 = vector.broadcast %7 : vector<1x128xf32> to vector<2x128xf32>
    %39 = arith.addf %37, %38 : vector<2x128xf32>
    %40 = arith.index_cast %c0_i32_14 : i32 to index
    %c0_20 = arith.constant 0 : index
    %c0_21 = arith.constant 0 : index
    %41 = vector.load %arg9[%40, %c0_20, %c0_21] : memref<1x2x128xf32, #tpu.memory_space<vmem>>, vector<1x2x128xf32>
    %42 = vector.shape_cast %41 : vector<1x2x128xf32> to vector<2x128xf32>
    %43 = vector.shape_cast %39 : vector<2x128xf32> to vector<1x2x128xf32>
    tpu.vector_store %arg9[%40, %c0_20, %c0_21], %43 {strides = array<i32>} : memref<1x2x128xf32, #tpu.memory_space<vmem>>, vector<1x2x128xf32>,
    %c1_i32 = arith.constant 1 : i32
    %c0_22 = arith.constant 0 : index
    %c0_23 = arith.constant 0 : index
    %44 = vector.load %arg10[%c0_22, %c0_23] : memref<2x32xf32, #tpu.memory_space<vmem>>, vector<2x32xf32>
    tpu.vector_store %arg10[%c0_22, %c0_23], %35 {strides = array<i32>} : memref<2x32xf32, #tpu.memory_space<vmem>>, vector<2x32xf32>,
    %c0_24 = arith.constant 0 : index
    %c0_25 = arith.constant 0 : index
    %45 = vector.load %arg11[%c0_24, %c0_25] : memref<2x32xf32, #tpu.memory_space<vmem>>, vector<2x32xf32>
    tpu.vector_store %arg11[%c0_24, %c0_25], %33 {strides = array<i32>} : memref<2x32xf32, #tpu.memory_space<vmem>>, vector<2x32xf32>,
    return
  }
  func.func @transform_0(%arg0: i32) -> (i32, i32, i32) {
    %c0_i32 = arith.constant 0 : i32
    %c0_i32_0 = arith.constant 0 : i32
    %c0_i32_1 = arith.constant 0 : i32
    return %arg0, %c0_i32, %c0_i32_0 : i32, i32, i32
  }
  func.func @transform_1(%arg0: i32) -> (i32, i32) {
    %c0_i32 = arith.constant 0 : i32
    %c0_i32_0 = arith.constant 0 : i32
    %c0_i32_1 = arith.constant 0 : i32
    return %c0_i32, %c0_i32_0 : i32, i32
  }
  func.func @transform_2(%arg0: i32) -> (i32, i32) {
    %c0_i32 = arith.constant 0 : i32
    %c0_i32_0 = arith.constant 0 : i32
    %c0_i32_1 = arith.constant 0 : i32
    return %c0_i32, %c0_i32_0 : i32, i32
  }
  func.func @transform_3(%arg0: i32) -> (i32, i32) {
    %c0_i32 = arith.constant 0 : i32
    %c0_i32_0 = arith.constant 0 : i32
    %c0_i32_1 = arith.constant 0 : i32
    return %c0_i32, %c0_i32_0 : i32, i32
  }
  func.func @transform_4(%arg0: i32) -> (i32, i32) {
    %c0_i32 = arith.constant 0 : i32
    %c0_i32_0 = arith.constant 0 : i32
    %c0_i32_1 = arith.constant 0 : i32
    return %c0_i32, %c0_i32_0 : i32, i32
  }
  func.func @transform_5(%arg0: i32) -> (i32, i32) {
    %c0_i32 = arith.constant 0 : i32
    %c0_i32_0 = arith.constant 0 : i32
    %c0_i32_1 = arith.constant 0 : i32
    return %c0_i32, %c0_i32_0 : i32, i32
  }
  func.func @transform_6(%arg0: i32) -> (i32, i32) {
    %c0_i32 = arith.constant 0 : i32
    %c0_i32_0 = arith.constant 0 : i32
    %c0_i32_1 = arith.constant 0 : i32
    return %c0_i32, %c0_i32_0 : i32, i32
  }
  func.func @transform_7(%arg0: i32) -> (i32, i32) {
    %c0_i32 = arith.constant 0 : i32
    %c0_i32_0 = arith.constant 0 : i32
    %c0_i32_1 = arith.constant 0 : i32
    return %c0_i32, %c0_i32_0 : i32, i32
  }
  func.func @transform_8(%arg0: i32) -> (i32, i32, i32) {
    %c0_i32 = arith.constant 0 : i32
    %c0_i32_0 = arith.constant 0 : i32
    %c0_i32_1 = arith.constant 0 : i32
    return %arg0, %c0_i32, %c0_i32_0 : i32, i32, i32
  }
  func.func @transform_9(%arg0: i32) -> (i32, i32) {
    %c0_i32 = arith.constant 0 : i32
    %c0_i32_0 = arith.constant 0 : i32
    %c0_i32_1 = arith.constant 0 : i32
    return %c0_i32, %c0_i32_0 : i32, i32
  }
  func.func @transform_10(%arg0: i32) -> (i32, i32) {
    %c0_i32 = arith.constant 0 : i32
    %c0_i32_0 = arith.constant 0 : i32
    %c0_i32_1 = arith.constant 0 : i32
    return %c0_i32, %c0_i32_0 : i32, i32
  }
}

</mosaic_0001>

<llo_original>
// kernel: lst_model_forward.1
$region0: #{lst_model_forward.1}
  #allocation0 [shape = 'u32[]', space=smem, size = 0x4, offset = 0x4, fixed_abs, tag = 'smem constant byte address 0x4 - core index']
  #allocation1 [shape = 'u32[144,128]{1,0:T(1,128)}', space=vmem, size = 0x12000, scoped, tag = 'internal scratch']
  %s0 = inlined_call_operand.vmem [shape: f32[1,2,16], index: 0, kind: input, shape index: {}]
  %s1 = inlined_call_operand.vmem [shape: f32[2,32], index: 1, kind: input, shape index: {}]
  %s2 = inlined_call_operand.vmem [shape: f32[2,32], index: 2, kind: input, shape index: {}]
  %s3 = inlined_call_operand.vmem [shape: bf16[16,128], index: 3, kind: input, shape index: {}]
  %s4 = inlined_call_operand.vmem [shape: bf16[32,128], index: 4, kind: input, shape index: {}]
  %s5 = inlined_call_operand.hbm [shape: f32[1,128], index: 5, kind: input, shape index: {}]
  %s6 = inlined_call_operand.hbm [shape: bf16[32,128], index: 6, kind: input, shape index: {}]
  %s7 = inlined_call_operand.vmem [shape: f32[1,128], index: 7, kind: input, shape index: {}]
  %s8 = inlined_call_operand.vmem [shape: f32[1,2,128], index: 8, kind: output, shape index: {0}]
  %s9 = inlined_call_operand.hbm [shape: f32[2,32], index: 9, kind: output, shape index: {1}]
  %s10 = inlined_call_operand.hbm [shape: f32[2,32], index: 10, kind: output, shape index: {2}]
  %11 = xla_tuple %s8, %s9, %s10
  %s12 = sld [smem:[#allocation0]]
  $region70: #{lst_model_forward.1} parent=0
    _
  %s14 = ssub.s32 1, %s12
  %s15 = scalar_select 0, %s14, %s12
  $region1: #{lst_model_forward.1} parent=0
    #allocation2 [shape = 'u8[512]{0}', space=vmem, size = 0x400, scoped, tag = 'input window, operand 5, single buffered']
    #allocation3 [shape = 's32[1]{0}', space=sflag, size = 0x4, scoped, tag = 'scoped memory for lst_model_forward.1']
    #allocation4 [shape = 's32[1]{0}', space=sflag, size = 0x4, scoped, tag = 'scoped memory for lst_model_forward.1']
    #allocation5 [shape = 'u8[8192]{0}', space=vmem, size = 0x2000, scoped, tag = 'input window, operand 6, single buffered']
    #allocation6 [shape = 's32[1]{0}', space=sflag, size = 0x4, scoped, tag = 'scoped memory for lst_model_forward.1']
    #allocation7 [shape = 'u8[1024]{0}', space=vmem, size = 0x400, scoped, tag = 'output window, operand 1, single buffered']
    #allocation8 [shape = 'u8[1024]{0}', space=vmem, size = 0x400, scoped, tag = 'output window, operand 2, single buffered']
    #allocation9 [shape = 's32[1]{0}', space=sflag, size = 0x4, scoped, tag = 'scoped memory for lst_model_forward.1']
    %16 = vsyncpa [#allocation3], 0
    %17 = vsyncpa [#allocation6], 0
    %18 = vsyncpa [#allocation4], 0
    %19 = vsyncpa [#allocation9], 0
    // Predicated region
    $region2: #{lst_model_forward.1} parent=1 // pred_check
      _
    $region3: #{lst_model_forward.1} parent=1 // pred_check_branch
      %21 = sbr.rel (0) target = $region5
    $region4: #{lst_model_forward.1} parent=1 // pred_region
      _
    $region5: #{lst_model_forward.1} parent=1 // pred_fallthru
      _
    // Predicated region
    $region6: #{lst_model_forward.1} parent=1 // pred_check
      _
    $region7: #{lst_model_forward.1} parent=1 // pred_check_branch
      %23 = sbr.rel (0) target = $region9
    $region8: #{lst_model_forward.1} parent=1 // pred_region
      _
    $region9: #{lst_model_forward.1} parent=1 // pred_fallthru
      _
    // Predicated region
    $region10: #{lst_model_forward.1} parent=1 // pred_check
      _
    $region11: #{lst_model_forward.1} parent=1 // pred_check_branch
      %25 = sbr.rel (0) target = $region13
    $region12: #{lst_model_forward.1} parent=1 // pred_region
      _
    $region13: #{lst_model_forward.1} parent=1 // pred_fallthru
      _
    // Predicated region
    $region14: #{lst_model_forward.1} parent=1 // pred_check
      _
    $region15: #{lst_model_forward.1} parent=1 // pred_check_branch
      %27 = sbr.rel (0) target = $region17
    $region16: #{lst_model_forward.1} parent=1 // pred_region
      _
    $region17: #{lst_model_forward.1} parent=1 // pred_fallthru
      _
    // Predicated region
    $region18: #{lst_model_forward.1} parent=1 // pred_check
      _
    $region19: #{lst_model_forward.1} parent=1 // pred_check_branch
      %29 = sbr.rel (0) target = $region21
    $region20: #{lst_model_forward.1} parent=1 // pred_region
      _
    $region21: #{lst_model_forward.1} parent=1 // pred_fallthru
      _
    // Predicated region
    $region22: #{lst_model_forward.1} parent=1 // pred_check
      _
    $region23: #{lst_model_forward.1} parent=1 // pred_check_branch
      %31 = sbr.rel (0) target = $region25
    $region24: #{lst_model_forward.1} parent=1 // pred_region
      %s33 = ssub.s32 16, 16
      %34 = vsyncadd [#allocation3], %s33
      %s36 = sshll.u32 [#allocation2], 4
      %s37 = int_to_ptr.vmem [resolvable:$true] %s36
      %39 = dma.hbm_to_vmem [thread:$0]  %s5, 16, %s37, [#allocation3]
    $region25: #{lst_model_forward.1} parent=1 // pred_fallthru
      _
    // Predicated region
    $region26: #{lst_model_forward.1} parent=1 // pred_check
      _
    $region27: #{lst_model_forward.1} parent=1 // pred_check_branch
      %41 = sbr.rel (0) target = $region29
    $region28: #{lst_model_forward.1} parent=1 // pred_region
      %s43 = ssub.s32 256, 256
      %44 = vsyncadd [#allocation6], %s43
      %s45 = sshll.u32 [#allocation5], 4
      %s46 = int_to_ptr.vmem [resolvable:$true] %s45
      %51 = dma.hbm_to_vmem [thread:$0]  %s6, 256, %s46, [#allocation6], 64, 64, 4
    $region29: #{lst_model_forward.1} parent=1 // pred_fallthru
      _
    // Predicated region
    $region30: #{lst_model_forward.1} parent=1 // pred_check
      _
    $region31: #{lst_model_forward.1} parent=1 // pred_check_branch
      %53 = sbr.rel (0) target = $region33
    $region32: #{lst_model_forward.1} parent=1 // pred_region
      _
    $region33: #{lst_model_forward.1} parent=1 // pred_fallthru
      _
    // Predicated region
    $region34: #{lst_model_forward.1} parent=1 // pred_check
      _
    $region35: #{lst_model_forward.1} parent=1 // pred_check_branch
      %55 = sbr.rel (0) target = $region37
    $region36: #{lst_model_forward.1} parent=1 // pred_region
      %56 = dma.done [#allocation3], 16
    $region37: #{lst_model_forward.1} parent=1 // pred_fallthru
      _
    // Predicated region
    $region38: #{lst_model_forward.1} parent=1 // pred_check
      _
    $region39: #{lst_model_forward.1} parent=1 // pred_check_branch
      %58 = sbr.rel (0) target = $region41
    $region40: #{lst_model_forward.1} parent=1 // pred_region
      %59 = dma.done [#allocation6], 256
    $region41: #{lst_model_forward.1} parent=1 // pred_fallthru
      _
    %p61 = scmp.eq.s32.totalorder 0, 0
    // Predicated region
    $region42: #{lst_model_forward.1} parent=1 // pred_check
      %p62 = pneg %p61
    $region43: #{lst_model_forward.1} parent=1 // pred_check_branch
      %64 = sbr.rel (%p62) target = $region45
    $region44: #{lst_model_forward.1} parent=1 // pred_region
      %v65 = vld [vmem:[%s1] sm:$0x3]
      %vm66 = vcmask 254976
      %67 = vst.msk [vmem:[#allocation7] sm:$0x3] %vm66, %v65
      %v68 = vld [vmem:[%s2] sm:$0x3]
      %69 = vst.msk [vmem:[#allocation8] sm:$0x3] %vm66, %v68
    $region45: #{lst_model_forward.1} parent=1 // pred_fallthru
      _
    %v70 = vld [vmem:[%s3] sm:$0xf]
    %v71 = vld [vmem:[%s3 + $0x4] sm:$0xf]
    %v72 = vld [vmem:[%s4] sm:$0xf]
    %v73 = vld [vmem:[%s4 + $0x4] sm:$0xf]
    %v74 = vld [vmem:[%s4 + $0x8] sm:$0xf]
    %v75 = vld [vmem:[%s4 + $0xc] sm:$0xf]
    %v76 = vld [vmem:[#allocation2] sm:$0x1]
    %v77 = vld [vmem:[#allocation5] sm:$0xf]
    %v78 = vld [vmem:[#allocation5 + $0x4] sm:$0xf]
    %v79 = vld [vmem:[#allocation5 + $0x8] sm:$0xf]
    %v80 = vld [vmem:[#allocation5 + $0xc] sm:$0xf]
    %v81 = vld [vmem:[%s7] sm:$0x1]
    %v82 = vld [vmem:[#allocation7] sm:$0x3]
    %v83 = vld [vmem:[#allocation8] sm:$0x3]
    %v84 = vld [vmem:[%s0] sm:$0x3]
    %v85 = vpack.c.bf16 %v84, %v84
    %v86 = vpack.c.bf16 %v82, %v82
    %v91 = vunpack.c.l.b16 %v72
    %v92 = vunpack.c.l.b16 %v73
    %v93 = vunpack.c.l.b16 %v74
    %v94 = vunpack.c.l.b16 %v75
    %v95 = vpack.c.b16 %v92, %v91
    %v96 = vpack.c.b16 %v94, %v93
    %vm99 = vcmask 261120
    %v101 = vsel %vm99, %v86, 0
    %103 = vmatprep.subr.bf16.mxu0 0
    %104 = vmatpush1.bf16.msra.mxu0 %v95
    %105 = vmatprep.subr.bf16.mxu0 0
    %106 = vmatpush1.bf16.msra.mxu0 %v96
    %107 = vmatprep.subr.bf16.mxu0 0
    %108 = vmatpush1.bf16.msra.mxu0 0
    %109 = vmatprep.subr.bf16.mxu0 0
    %110 = vmatpush1.bf16.msra.mxu0 0
    %111 = vmatprep.subr.bf16.mxu0 0
    %112 = vmatpush1.bf16.msra.mxu0 0
    %113 = vmatprep.subr.bf16.mxu0 0
    %114 = vmatpush1.bf16.msra.mxu0 0
    %115 = vmatprep.subr.bf16.mxu0 0
    %116 = vmatpush1.bf16.msra.mxu0 0
    %117 = vmatprep.subr.bf16.mxu0 0
    %118 = vmatpush1.bf16.msra.mxu0 0
    %119 = vmatprep.subr.bf16.mxu0 0
    %120 = vmatpush1.bf16.msra.mxu0 0
    %121 = vmatprep.subr.bf16.mxu0 0
    %122 = vmatpush1.bf16.msra.mxu0 0
    %123 = vmatprep.subr.bf16.mxu0 0
    %124 = vmatpush1.bf16.msra.mxu0 0
    %125 = vmatprep.subr.bf16.mxu0 0
    %126 = vmatpush1.bf16.msra.mxu0 0
    %127 = vmatprep.subr.bf16.mxu0 0
    %128 = vmatpush1.bf16.msra.mxu0 0
    %129 = vmatprep.subr.bf16.mxu0 0
    %130 = vmatpush1.bf16.msra.mxu0 0
    %131 = vmatprep.subr.bf16.mxu0 0
    %132 = vmatpush1.bf16.msra.mxu0 0
    %133 = vmatprep.subr.bf16.mxu0 0
    %134 = vmatpush1.bf16.msra.mxu0 0
    %135 = vmatprep.mubr.bf16.mxu0 0
    %136 = vmatmul.mubr.bf16.gmra.mrb[0].mxu0 %v101
    %v137 = vpop.f32.mrb[0].mxu0
    %v138 = vadd.f32 0.0, %v137
    %v139 = vpop.f32.mrb[0].mxu0
    %v140 = vpop.f32.mrb[0].mxu0
    %v141 = vpop.f32.mrb[0].mxu0
    %142 = vdwg.mxu0
    %v145 = vunpack.c.l.b16 %v70
    %v146 = vunpack.c.l.b16 %v71
    %v147 = vpack.c.b16 %v146, %v145
    %vm149 = vcmask 130048
    %v151 = vsel %vm149, %v85, 0
    %153 = vmatprep.subr.bf16.mxu0 0
    %154 = vmatpush1.bf16.msra.mxu0 %v147
    %155 = vmatprep.subr.bf16.mxu0 0
    %156 = vmatpush1.bf16.msra.mxu0 0
    %157 = vmatprep.subr.bf16.mxu0 0
    %158 = vmatpush1.bf16.msra.mxu0 0
    %159 = vmatprep.subr.bf16.mxu0 0
    %160 = vmatpush1.bf16.msra.mxu0 0
    %161 = vmatprep.subr.bf16.mxu0 0
    %162 = vmatpush1.bf16.msra.mxu0 0
    %163 = vmatprep.subr.bf16.mxu0 0
    %164 = vmatpush1.bf16.msra.mxu0 0
    %165 = vmatprep.subr.bf16.mxu0 0
    %166 = vmatpush1.bf16.msra.mxu0 0
    %167 = vmatprep.subr.bf16.mxu0 0
    %168 = vmatpush1.bf16.msra.mxu0 0
    %169 = vmatprep.subr.bf16.mxu0 0
    %170 = vmatpush1.bf16.msra.mxu0 0
    %171 = vmatprep.subr.bf16.mxu0 0
    %172 = vmatpush1.bf16.msra.mxu0 0
    %173 = vmatprep.subr.bf16.mxu0 0
    %174 = vmatpush1.bf16.msra.mxu0 0
    %175 = vmatprep.subr.bf16.mxu0 0
    %176 = vmatpush1.bf16.msra.mxu0 0
    %177 = vmatprep.subr.bf16.mxu0 0
    %178 = vmatpush1.bf16.msra.mxu0 0
    %179 = vmatprep.subr.bf16.mxu0 0
    %180 = vmatpush1.bf16.msra.mxu0 0
    %181 = vmatprep.subr.bf16.mxu0 0
    %182 = vmatpush1.bf16.msra.mxu0 0
    %183 = vmatprep.subr.bf16.mxu0 0
    %184 = vmatpush1.bf16.msra.mxu0 0
    %185 = vmatprep.mubr.bf16.mxu0 0
    %186 = vmatmul.mubr.bf16.gmra.mrb[0].mxu0 %v151
    %v187 = vpop.f32.mrb[0].mxu0
    %v188 = vadd.f32 %v138, %v187
    %v189 = vpop.f32.mrb[0].mxu0
    %v190 = vpop.f32.mrb[0].mxu0
    %v191 = vpop.f32.mrb[0].mxu0
    %192 = vdwg.mxu0
    %v194 = vlaneseq
    %v195 = vshrl.u32 %v194, 7
    %v196 = vsub.s32 0, %v195
    %v197 = vrot.slane %v76, %v196
    %v199 = vadd.f32 %v188, %v197
    %v200 = vxor.u32 %v199, 2147483648
    %v201 = vmul.f32 %v200, 1.442695
    %v202 = vpow.pop %v201
    %v203 = vadd.f32 %v202, 1.0
    %v204 = vrcp.pop %v203
    %v205 = vmul.f32 1.0, %v204
    %v206 = vtanh.pop %v199
    %208 = vrot.lane.b32.xlu0 %v83, 32
    %v209 = vpop.permute.xlu0 %208
    %v211 = vmul.f32 %v205, %v209
    %213 = vrot.lane.b32.xlu0 %v206, 32
    %v214 = vpop.permute.xlu0 %213
    %v216 = vmul.f32 %v205, %v214
    %218 = vrot.lane.b32.xlu0 %v216, 32
    %v219 = vpop.permute.xlu0 %218
    %v221 = vadd.f32 %v211, %v219
    %v222 = vtanh.pop %v221
    %224 = vrot.lane.b32.xlu0 %v222, 32
    %v225 = vpop.permute.xlu0 %224
    %v227 = vmul.f32 %v205, %v225
    %v228 = vpack.c.bf16 %v227, %v227
    %v230 = vlaneseq
    %v231 = vshrl.u32 %v230, 7
    %v232 = vsub.s32 0, %v231
    %v233 = vrot.slane %v81, %v232
    %236 = vrot.lane.b32.xlu0 %v228, 64
    %v237 = vpop.permute.xlu0 %236
    %v242 = vunpack.c.l.b16 %v77
    %v243 = vunpack.c.l.b16 %v78
    %v244 = vunpack.c.l.b16 %v79
    %v245 = vunpack.c.l.b16 %v80
    %v246 = vpack.c.b16 %v243, %v242
    %v247 = vpack.c.b16 %v245, %v244
    %v251 = vsel %vm99, %v237, 0
    %253 = vmatprep.subr.bf16.mxu0 0
    %254 = vmatpush1.bf16.msra.mxu0 %v246
    %255 = vmatprep.subr.bf16.mxu0 0
    %256 = vmatpush1.bf16.msra.mxu0 %v247
    %257 = vmatprep.subr.bf16.mxu0 0
    %258 = vmatpush1.bf16.msra.mxu0 0
    %259 = vmatprep.subr.bf16.mxu0 0
    %260 = vmatpush1.bf16.msra.mxu0 0
    %261 = vmatprep.subr.bf16.mxu0 0
    %262 = vmatpush1.bf16.msra.mxu0 0
    %263 = vmatprep.subr.bf16.mxu0 0
    %264 = vmatpush1.bf16.msra.mxu0 0
    %265 = vmatprep.subr.bf16.mxu0 0
    %266 = vmatpush1.bf16.msra.mxu0 0
    %267 = vmatprep.subr.bf16.mxu0 0
    %268 = vmatpush1.bf16.msra.mxu0 0
    %269 = vmatprep.subr.bf16.mxu0 0
    %270 = vmatpush1.bf16.msra.mxu0 0
    %271 = vmatprep.subr.bf16.mxu0 0
    %272 = vmatpush1.bf16.msra.mxu0 0
    %273 = vmatprep.subr.bf16.mxu0 0
    %274 = vmatpush1.bf16.msra.mxu0 0
    %275 = vmatprep.subr.bf16.mxu0 0
    %276 = vmatpush1.bf16.msra.mxu0 0
    %277 = vmatprep.subr.bf16.mxu0 0
    %278 = vmatpush1.bf16.msra.mxu0 0
    %279 = vmatprep.subr.bf16.mxu0 0
    %280 = vmatpush1.bf16.msra.mxu0 0
    %281 = vmatprep.subr.bf16.mxu0 0
    %282 = vmatpush1.bf16.msra.mxu0 0
    %283 = vmatprep.subr.bf16.mxu0 0
    %284 = vmatpush1.bf16.msra.mxu0 0
    %285 = vmatprep.mubr.bf16.mxu0 0
    %286 = vmatmul.mubr.bf16.gmra.mrb[0].mxu0 %v251
    %v287 = vpop.f32.mrb[0].mxu0
    %v288 = vadd.f32 %v233, %v287
    %v289 = vpop.f32.mrb[0].mxu0
    %v290 = vpop.f32.mrb[0].mxu0
    %v291 = vpop.f32.mrb[0].mxu0
    %292 = vdwg.mxu0
    %293 = vst [vmem:[%s8] sm:$0x3] %v288
    %295 = vrot.lane.b32.xlu0 %v227, 64
    %v296 = vpop.permute.xlu0 %295
    %vm298 = vcmask 254976
    %299 = vst.msk [vmem:[#allocation7] sm:$0x3] %vm298, %v296
    %301 = vrot.lane.b32.xlu0 %v221, 96
    %v302 = vpop.permute.xlu0 %301
    %304 = vst.msk [vmem:[#allocation8] sm:$0x3] %vm298, %v302
    // Predicated region
    $region46: #{lst_model_forward.1} parent=1 // pred_check
      _
    $region47: #{lst_model_forward.1} parent=1 // pred_check_branch
      %306 = sbr.rel (0) target = $region49
    $region48: #{lst_model_forward.1} parent=1 // pred_region
      _
    $region49: #{lst_model_forward.1} parent=1 // pred_fallthru
      _
    // Predicated region
    $region50: #{lst_model_forward.1} parent=1 // pred_check
      _
    $region51: #{lst_model_forward.1} parent=1 // pred_check_branch
      %308 = sbr.rel (0) target = $region53
    $region52: #{lst_model_forward.1} parent=1 // pred_region
      %s310 = ssub.s32 32, 32
      %311 = vsyncadd [#allocation4], %s310
      %s313 = sshll.u32 [#allocation7], 4
      %s314 = int_to_ptr.vmem [resolvable:$true] %s313
      %316 = dma.vmem_to_hbm [thread:$0]  %s314, 32, %s9, [#allocation4]
    $region53: #{lst_model_forward.1} parent=1 // pred_fallthru
      _
    // Predicated region
    $region54: #{lst_model_forward.1} parent=1 // pred_check
      _
    $region55: #{lst_model_forward.1} parent=1 // pred_check_branch
      %318 = sbr.rel (0) target = $region57
    $region56: #{lst_model_forward.1} parent=1 // pred_region
      %s320 = ssub.s32 32, 32
      %321 = vsyncadd [#allocation9], %s320
      %s323 = sshll.u32 [#allocation8], 4
      %s324 = int_to_ptr.vmem [resolvable:$true] %s323
      %326 = dma.vmem_to_hbm [thread:$0]  %s324, 32, %s10, [#allocation9]
    $region57: #{lst_model_forward.1} parent=1 // pred_fallthru
      _
    // Predicated region
    $region58: #{lst_model_forward.1} parent=1 // pred_check
      _
    $region59: #{lst_model_forward.1} parent=1 // pred_check_branch
      %328 = sbr.rel (0) target = $region61
    $region60: #{lst_model_forward.1} parent=1 // pred_region
      _
    $region61: #{lst_model_forward.1} parent=1 // pred_fallthru
      _
    // Predicated region
    $region62: #{lst_model_forward.1} parent=1 // pred_check
      _
    $region63: #{lst_model_forward.1} parent=1 // pred_check_branch
      %330 = sbr.rel (0) target = $region65
    $region64: #{lst_model_forward.1} parent=1 // pred_region
      %331 = dma.done [#allocation4], 32
    $region65: #{lst_model_forward.1} parent=1 // pred_fallthru
      _
    // Predicated region
    $region66: #{lst_model_forward.1} parent=1 // pred_check
      _
    $region67: #{lst_model_forward.1} parent=1 // pred_check_branch
      %333 = sbr.rel (0) target = $region69
    $region68: #{lst_model_forward.1} parent=1 // pred_region
      %334 = dma.done [#allocation9], 32
    $region69: #{lst_model_forward.1} parent=1 // pred_fallthru
      _
    %335 = vsyncpa [#allocation3], 1
    %336 = vsyncpa [#allocation6], 1
    %337 = vsyncpa [#allocation4], 1
    %338 = vsyncpa [#allocation9], 1

</llo_original>
